<compile_context>
chip_gen: v7x
topology: tpu7x:2x2x1
jax: 0.10.0
libtpu: 0.0.40
codegen_flags: <defaults>
</compile_context>

<pallas_src>
import jax
import jax.numpy as jnp
from jax.experimental import pallas as pl
from jax.experimental.pallas import tpu as pltpu


def _ray_encoder_kernel(x_ref, w1_ref, b1_ref, w2_ref, b2_ref, w3_ref, b3_ref,
                        out_ref):
    x = x_ref[...]                                                   # (TM, C)
    # Conv1d(C -> 16, k=1, stride=4) on a length-1 axis == matmul, + ReLU
    h = jnp.dot(x, w1_ref[...], preferred_element_type=jnp.float32)
    h = jnp.maximum(h + b1_ref[...], 0.0)
    # Conv1d(16 -> 32, k=1, stride=2) on a length-1 axis == matmul, + ReLU
    h = jnp.dot(h, w2_ref[...], preferred_element_type=jnp.float32)
    h = jnp.maximum(h + b2_ref[...], 0.0)
    # Flatten is a no-op for (TM, 32); Linear(32 -> F) + ReLU
    h = jnp.dot(h, w3_ref[...], preferred_element_type=jnp.float32)
    out_ref[...] = jnp.maximum(h + b3_ref[...], 0.0).astype(out_ref.dtype)


def ray_encoder_forward(s, params, *, tm=512):
    """JAX/Pallas equivalent of RayEncoder.forward."""
    w1, b1, w2, b2, w3, b3 = params
    if s.ndim == 3:
        # forward() only unsqueezes 2-D input to a length-1 spatial axis; only
        # L == 1 is consistent with the module's own n_flatten probe.
        # TODO(synk): general L > 1 strided-Conv1d path (the module's own Linear
        # layer would shape-error for L > 1, so it is intentionally not implemented).
        s = s[..., 0]
    s = s.astype(jnp.float32)
    B, C = s.shape
    F = w3.shape[1]

    # Row tile: multiple of 8 sublanes, clamped to the (padded) batch.
    tm = max(8, min(tm, pl.cdiv(B, 8) * 8))
    tm = pl.cdiv(tm, 8) * 8
    Bp = pl.cdiv(B, tm) * tm
    if Bp != B:
        s = jnp.pad(s, ((0, Bp - B), (0, 0)))

    out = pl.pallas_call(
        _ray_encoder_kernel,
        out_shape=jax.ShapeDtypeStruct((Bp, F), jnp.float32),
        grid_spec=pltpu.PrefetchScalarGridSpec(
            num_scalar_prefetch=0,
            grid=(Bp // tm,),
            in_specs=[
                pl.BlockSpec((tm, C), lambda i: (i, 0)),    # rays: streamed per tile
                pl.BlockSpec(w1.shape, lambda i: (0, 0)),   # weights/biases: VMEM-resident
                pl.BlockSpec(b1.shape, lambda i: (0, 0)),
                pl.BlockSpec(w2.shape, lambda i: (0, 0)),
                pl.BlockSpec(b2.shape, lambda i: (0, 0)),
                pl.BlockSpec(w3.shape, lambda i: (0, 0)),
                pl.BlockSpec(b3.shape, lambda i: (0, 0)),
            ],
            out_specs=pl.BlockSpec((tm, F), lambda i: (i, 0)),
        ),
        compiler_params=pltpu.CompilerParams(
            # Row tiles are independent -> pipelined, and shardable across the
            # two TensorCores on v7x.  No cost on v5e/v6e.
            dimension_semantics=("parallel",),
        ),
    )(s, w1, b1, w2, b2, w3, b3)
    return out if Bp == B else out[:B]


def _reference(s, params):
    """Pure-JAX mirror of the PyTorch module (strided Conv1d -> Flatten -> Linear)."""
    w1, b1, w2, b2, w3, b3 = params
    if s.ndim == 2:
        s = s[:, :, None]                                  # torch.unsqueeze(s, dim=2)
    dn = ("NCH", "OIH", "NCH")
    hi = jax.lax.Precision.HIGHEST
    y = jax.lax.conv_general_dilated(
        s, jnp.transpose(w1)[:, :, None], window_strides=(4,), padding="VALID",
        dimension_numbers=dn, precision=hi)
    y = jax.nn.relu(y + b1.reshape(1, -1, 1))              # Conv1d(C,16,1,4) + ReLU
    y = jax.lax.conv_general_dilated(
        y, jnp.transpose(w2)[:, :, None], window_strides=(2,), padding="VALID",
        dimension_numbers=dn, precision=hi)
    y = jax.nn.relu(y + b2.reshape(1, -1, 1))              # Conv1d(16,32,1,2) + ReLU
    y = y.reshape(y.shape[0], -1)                          # Flatten -> (B, 32)
    y = jax.nn.relu(jnp.dot(y, w3, precision=hi) + b3)     # Linear + ReLU
    return y


if __name__ == "__main__":
    inputchannel = 4     # channels per ray sample
    features_dim = 128   # lane-dense output width (multiple of 128)
    n_rays = 256         # "batch" of rays

    key = jax.random.PRNGKey(0)
    ks = jax.random.split(key, 7)
    # Conv1d(kernel_size=1) weights expressed directly as (in, out) matmul matrices.
    w1 = 0.30 * jax.random.normal(ks[0], (inputchannel, 16), jnp.float32)
    b1 = 0.10 * jax.random.normal(ks[1], (1, 16), jnp.float32)
    w2 = 0.15 * jax.random.normal(ks[2], (16, 32), jnp.float32)
    b2 = 0.10 * jax.random.normal(ks[3], (1, 32), jnp.float32)
    w3 = 0.10 * jax.random.normal(ks[4], (32, features_dim), jnp.float32)
    b3 = 0.10 * jax.random.normal(ks[5], (1, features_dim), jnp.float32)
    params = (w1, b1, w2, b2, w3, b3)

    s = jax.random.normal(ks[6], (n_rays, inputchannel), jnp.float32)

    out = ray_encoder_forward(s, params)
    out = jax.block_until_ready(out)

    ref = _reference(s, params)
    assert out.shape == (n_rays, features_dim)
    # Tolerance covers the MXU's bf16-pass execution of f32 matmuls under
    # default precision; structural bugs would produce O(1) errors.
    assert jnp.allclose(out, ref, atol=3e-2, rtol=3e-2), "mismatch vs reference"

    print("KERNEL_OK")
</pallas_src>

<mosaic_0001>
module attributes {stable_mosaic.version = 11 : i64} {
  func.func @_ray_encoder_kernel(%arg0: i32, %arg1: memref<256x4xf32, #tpu.memory_space<vmem>>, %arg2: memref<4x16xf32, #tpu.memory_space<vmem>>, %arg3: memref<1x16xf32, #tpu.memory_space<vmem>>, %arg4: memref<16x32xf32, #tpu.memory_space<vmem>>, %arg5: memref<1x32xf32, #tpu.memory_space<vmem>>, %arg6: memref<32x128xf32, #tpu.memory_space<vmem>>, %arg7: memref<1x128xf32, #tpu.memory_space<vmem>>, %arg8: memref<256x128xf32, #tpu.memory_space<vmem>>) attributes {dimension_semantics = [#tpu.dimension_semantics<parallel>], iteration_bounds = array<i64: 1>, scalar_prefetch = 0 : i64, scratch_operands = 0 : i64, tpu.core_type = #tpu.core_type<tc>, window_params = [{transform_indices = @transform_0, window_bounds = array<i64: 256, 4>}, {pipeline_mode = #tpu.pipeline_mode<synchronous>, transform_indices = @transform_1, window_bounds = array<i64: 4, 16>}, {pipeline_mode = #tpu.pipeline_mode<synchronous>, transform_indices = @transform_2, window_bounds = array<i64: 1, 16>}, {pipeline_mode = #tpu.pipeline_mode<synchronous>, transform_indices = @transform_3, window_bounds = array<i64: 16, 32>}, {pipeline_mode = #tpu.pipeline_mode<synchronous>, transform_indices = @transform_4, window_bounds = array<i64: 1, 32>}, {pipeline_mode = #tpu.pipeline_mode<synchronous>, transform_indices = @transform_5, window_bounds = array<i64: 32, 128>}, {pipeline_mode = #tpu.pipeline_mode<synchronous>, transform_indices = @transform_6, window_bounds = array<i64: 1, 128>}, {transform_indices = @transform_7, window_bounds = array<i64: 256, 128>}]} {
    %c0 = arith.constant 0 : index
    %c0_0 = arith.constant 0 : index
    %0 = vector.load %arg1[%c0, %c0_0] : memref<256x4xf32, #tpu.memory_space<vmem>>, vector<256x4xf32>
    %c0_1 = arith.constant 0 : index
    %c0_2 = arith.constant 0 : index
    %1 = vector.load %arg2[%c0_1, %c0_2] : memref<4x16xf32, #tpu.memory_space<vmem>>, vector<4x16xf32>
    %cst = arith.constant dense<0.000000e+00> : vector<256x16xf32>
    %2 = tpu.matmul %0, %1, %cst {dimension_numbers = #tpu.dot_dimension_numbers<[1], [0], [0], [1], [0, 0, 1, 1], [], []>} : vector<256x4xf32>, vector<4x16xf32>, vector<256x16xf32> -> vector<256x16xf32>
    %c0_3 = arith.constant 0 : index
    %c0_4 = arith.constant 0 : index
    %3 = vector.load %arg3[%c0_3, %c0_4] : memref<1x16xf32, #tpu.memory_space<vmem>>, vector<1x16xf32>
    %4 = vector.broadcast %3 : vector<1x16xf32> to vector<256x16xf32>
    %5 = arith.addf %2, %4 : vector<256x16xf32>
    %cst_5 = arith.constant 0.000000e+00 : f32
    %6 = vector.broadcast %cst_5 : f32 to vector<256x16xf32>
    %7 = arith.maximumf %5, %6 : vector<256x16xf32>
    %c0_6 = arith.constant 0 : index
    %c0_7 = arith.constant 0 : index
    %8 = vector.load %arg4[%c0_6, %c0_7] : memref<16x32xf32, #tpu.memory_space<vmem>>, vector<16x32xf32>
    %cst_8 = arith.constant dense<0.000000e+00> : vector<256x32xf32>
    %9 = tpu.matmul %7, %8, %cst_8 {dimension_numbers = #tpu.dot_dimension_numbers<[1], [0], [0], [1], [0, 0, 1, 1], [], []>} : vector<256x16xf32>, vector<16x32xf32>, vector<256x32xf32> -> vector<256x32xf32>
    %c0_9 = arith.constant 0 : index
    %c0_10 = arith.constant 0 : index
    %10 = vector.load %arg5[%c0_9, %c0_10] : memref<1x32xf32, #tpu.memory_space<vmem>>, vector<1x32xf32>
    %11 = vector.broadcast %10 : vector<1x32xf32> to vector<256x32xf32>
    %12 = arith.addf %9, %11 : vector<256x32xf32>
    %cst_11 = arith.constant 0.000000e+00 : f32
    %13 = vector.broadcast %cst_11 : f32 to vector<256x32xf32>
    %14 = arith.maximumf %12, %13 : vector<256x32xf32>
    %c0_12 = arith.constant 0 : index
    %c0_13 = arith.constant 0 : index
    %15 = vector.load %arg6[%c0_12, %c0_13] : memref<32x128xf32, #tpu.memory_space<vmem>>, vector<32x128xf32>
    %cst_14 = arith.constant dense<0.000000e+00> : vector<256x128xf32>
    %16 = tpu.matmul %14, %15, %cst_14 {dimension_numbers = #tpu.dot_dimension_numbers<[1], [0], [0], [1], [0, 0, 1, 1], [], []>} : vector<256x32xf32>, vector<32x128xf32>, vector<256x128xf32> -> vector<256x128xf32>
    %c0_15 = arith.constant 0 : index
    %c0_16 = arith.constant 0 : index
    %17 = vector.load %arg7[%c0_15, %c0_16] : memref<1x128xf32, #tpu.memory_space<vmem>>, vector<1x128xf32>
    %18 = vector.broadcast %17 : vector<1x128xf32> to vector<256x128xf32>
    %19 = arith.addf %16, %18 : vector<256x128xf32>
    %cst_17 = arith.constant 0.000000e+00 : f32
    %20 = vector.broadcast %cst_17 : f32 to vector<256x128xf32>
    %21 = arith.maximumf %19, %20 : vector<256x128xf32>
    %c0_18 = arith.constant 0 : index
    %c0_19 = arith.constant 0 : index
    %22 = vector.load %arg8[%c0_18, %c0_19] : memref<256x128xf32, #tpu.memory_space<vmem>>, vector<256x128xf32>
    tpu.vector_store %arg8[%c0_18, %c0_19], %21 {strides = array<i32>} : memref<256x128xf32, #tpu.memory_space<vmem>>, vector<256x128xf32>,
    return
  }
  func.func @transform_0(%arg0: i32) -> (i32, i32) {
    %c0_i32 = arith.constant 0 : i32
    %c0_i32_0 = arith.constant 0 : i32
    return %arg0, %c0_i32 : i32, i32
  }
  func.func @transform_1(%arg0: i32) -> (i32, i32) {
    %c0_i32 = arith.constant 0 : i32
    %c0_i32_0 = arith.constant 0 : i32
    %c0_i32_1 = arith.constant 0 : i32
    return %c0_i32, %c0_i32_0 : i32, i32
  }
  func.func @transform_2(%arg0: i32) -> (i32, i32) {
    %c0_i32 = arith.constant 0 : i32
    %c0_i32_0 = arith.constant 0 : i32
    %c0_i32_1 = arith.constant 0 : i32
    return %c0_i32, %c0_i32_0 : i32, i32
  }
  func.func @transform_3(%arg0: i32) -> (i32, i32) {
    %c0_i32 = arith.constant 0 : i32
    %c0_i32_0 = arith.constant 0 : i32
    %c0_i32_1 = arith.constant 0 : i32
    return %c0_i32, %c0_i32_0 : i32, i32
  }
  func.func @transform_4(%arg0: i32) -> (i32, i32) {
    %c0_i32 = arith.constant 0 : i32
    %c0_i32_0 = arith.constant 0 : i32
    %c0_i32_1 = arith.constant 0 : i32
    return %c0_i32, %c0_i32_0 : i32, i32
  }
  func.func @transform_5(%arg0: i32) -> (i32, i32) {
    %c0_i32 = arith.constant 0 : i32
    %c0_i32_0 = arith.constant 0 : i32
    %c0_i32_1 = arith.constant 0 : i32
    return %c0_i32, %c0_i32_0 : i32, i32
  }
  func.func @transform_6(%arg0: i32) -> (i32, i32) {
    %c0_i32 = arith.constant 0 : i32
    %c0_i32_0 = arith.constant 0 : i32
    %c0_i32_1 = arith.constant 0 : i32
    return %c0_i32, %c0_i32_0 : i32, i32
  }
  func.func @transform_7(%arg0: i32) -> (i32, i32) {
    %c0_i32 = arith.constant 0 : i32
    %c0_i32_0 = arith.constant 0 : i32
    return %arg0, %c0_i32 : i32, i32
  }
}

</mosaic_0001>

<llo_original>
// kernel: tpu_custom_call.1
$region0: #{tpu_custom_call.1}
  #allocation0 [shape = 'u32[]', space=smem, size = 0x4, offset = 0x4, fixed_abs, tag = 'smem constant byte address 0x4 - core index']
  #allocation1 [shape = 'u32[144,128]{1,0:T(1,128)}', space=vmem, size = 0x12000, scoped, tag = 'internal scratch']
  %s0 = inlined_call_operand.vmem [shape: f32[256,4], index: 0, kind: input, shape index: {}]
  %s1 = inlined_call_operand.vmem [shape: f32[4,16], index: 1, kind: input, shape index: {}]
  %s2 = inlined_call_operand.vmem [shape: f32[1,16], index: 2, kind: input, shape index: {}]
  %s3 = inlined_call_operand.vmem [shape: f32[16,32], index: 3, kind: input, shape index: {}]
  %s4 = inlined_call_operand.vmem [shape: f32[1,32], index: 4, kind: input, shape index: {}]
  %s5 = inlined_call_operand.vmem [shape: f32[32,128], index: 5, kind: input, shape index: {}]
  %s6 = inlined_call_operand.vmem [shape: f32[1,128], index: 6, kind: input, shape index: {}]
  %s7 = inlined_call_operand.hbm [shape: f32[256,128], index: 7, kind: output, shape index: {}]
  %s8 = sld [smem:[#allocation0]]
  $region38: #{tpu_custom_call.1} parent=0
    _
  %s10 = ssub.s32 1, %s8
  %s11 = scalar_select 0, %s10, %s8
  $region1: #{tpu_custom_call.1} parent=0
    #allocation2 [shape = 'u8[131072]{0}', space=vmem, size = 0x20000, scoped, tag = 'output window, operand 0, single buffered']
    #allocation3 [shape = 's32[1]{0}', space=sflag, size = 0x4, scoped, tag = 'scoped memory for tpu_custom_call.1']
    %12 = vsyncpa [#allocation3], 0
    // Predicated region
    $region2: #{tpu_custom_call.1} parent=1 // pred_check
      _
    $region3: #{tpu_custom_call.1} parent=1 // pred_check_branch
      %14 = sbr.rel (0) target = $region5
    $region4: #{tpu_custom_call.1} parent=1 // pred_region
      _
    $region5: #{tpu_custom_call.1} parent=1 // pred_fallthru
      _
    // Predicated region
    $region6: #{tpu_custom_call.1} parent=1 // pred_check
      _
    $region7: #{tpu_custom_call.1} parent=1 // pred_check_branch
      %16 = sbr.rel (0) target = $region9
    $region8: #{tpu_custom_call.1} parent=1 // pred_region
      _
    $region9: #{tpu_custom_call.1} parent=1 // pred_fallthru
      _
    // Predicated region
    $region10: #{tpu_custom_call.1} parent=1 // pred_check
      _
    $region11: #{tpu_custom_call.1} parent=1 // pred_check_branch
      %18 = sbr.rel (0) target = $region13
    $region12: #{tpu_custom_call.1} parent=1 // pred_region
      _
    $region13: #{tpu_custom_call.1} parent=1 // pred_fallthru
      _
    // Predicated region
    $region14: #{tpu_custom_call.1} parent=1 // pred_check
      _
    $region15: #{tpu_custom_call.1} parent=1 // pred_check_branch
      %20 = sbr.rel (0) target = $region17
    $region16: #{tpu_custom_call.1} parent=1 // pred_region
      _
    $region17: #{tpu_custom_call.1} parent=1 // pred_fallthru
      _
    // Predicated region
    $region18: #{tpu_custom_call.1} parent=1 // pred_check
      _
    $region19: #{tpu_custom_call.1} parent=1 // pred_check_branch
      %22 = sbr.rel (0) target = $region21
    $region20: #{tpu_custom_call.1} parent=1 // pred_region
      _
    $region21: #{tpu_custom_call.1} parent=1 // pred_fallthru
      _
    // Predicated region
    $region22: #{tpu_custom_call.1} parent=1 // pred_check
      _
    $region23: #{tpu_custom_call.1} parent=1 // pred_check_branch
      %24 = sbr.rel (0) target = $region25
    $region24: #{tpu_custom_call.1} parent=1 // pred_region
      _
    $region25: #{tpu_custom_call.1} parent=1 // pred_fallthru
      _
    // Predicated region
    $region26: #{tpu_custom_call.1} parent=1 // pred_check
      _
    $region27: #{tpu_custom_call.1} parent=1 // pred_check_branch
      %26 = sbr.rel (0) target = $region29
    $region28: #{tpu_custom_call.1} parent=1 // pred_region
      _
    $region29: #{tpu_custom_call.1} parent=1 // pred_fallthru
      _
    %v27 = vld [vmem:[%s0] sm:$0xff]
    %v28 = vld [vmem:[%s0 + $0x8] sm:$0xff]
    %v29 = vld [vmem:[%s0 + $0x10] sm:$0xff]
    %v30 = vld [vmem:[%s0 + $0x18] sm:$0xff]
    %v31 = vld [vmem:[%s0 + $0x20] sm:$0xff]
    %v32 = vld [vmem:[%s0 + $0x28] sm:$0xff]
    %v33 = vld [vmem:[%s0 + $0x30] sm:$0xff]
    %v34 = vld [vmem:[%s0 + $0x38] sm:$0xff]
    %v35 = vld [vmem:[%s0 + $0x40] sm:$0xff]
    %v36 = vld [vmem:[%s0 + $0x48] sm:$0xff]
    %v37 = vld [vmem:[%s0 + $0x50] sm:$0xff]
    %v38 = vld [vmem:[%s0 + $0x58] sm:$0xff]
    %v39 = vld [vmem:[%s0 + $0x60] sm:$0xff]
    %v40 = vld [vmem:[%s0 + $0x68] sm:$0xff]
    %v41 = vld [vmem:[%s0 + $0x70] sm:$0xff]
    %v42 = vld [vmem:[%s0 + $0x78] sm:$0xff]
    %v43 = vld [vmem:[%s0 + $0x80] sm:$0xff]
    %v44 = vld [vmem:[%s0 + $0x88] sm:$0xff]
    %v45 = vld [vmem:[%s0 + $0x90] sm:$0xff]
    %v46 = vld [vmem:[%s0 + $0x98] sm:$0xff]
    %v47 = vld [vmem:[%s0 + $0xa0] sm:$0xff]
    %v48 = vld [vmem:[%s0 + $0xa8] sm:$0xff]
    %v49 = vld [vmem:[%s0 + $0xb0] sm:$0xff]
    %v50 = vld [vmem:[%s0 + $0xb8] sm:$0xff]
    %v51 = vld [vmem:[%s0 + $0xc0] sm:$0xff]
    %v52 = vld [vmem:[%s0 + $0xc8] sm:$0xff]
    %v53 = vld [vmem:[%s0 + $0xd0] sm:$0xff]
    %v54 = vld [vmem:[%s0 + $0xd8] sm:$0xff]
    %v55 = vld [vmem:[%s0 + $0xe0] sm:$0xff]
    %v56 = vld [vmem:[%s0 + $0xe8] sm:$0xff]
    %v57 = vld [vmem:[%s0 + $0xf0] sm:$0xff]
    %v58 = vld [vmem:[%s0 + $0xf8] sm:$0xff]
    %v59 = vld [vmem:[%s1] sm:$0xf]
    %v60 = vld [vmem:[%s2] sm:$0x1]
    %v62 = vlaneseq
    %v63 = vshrl.u32 %v62, 7
    %v64 = vsub.s32 0, %v63
    %v65 = vrot.slane %v60, %v64
    %vm67 = vcmask 31744
    %v69 = vsel %vm67, %v27, 0
    %v72 = vsel %vm67, %v28, 0
    %v75 = vsel %vm67, %v29, 0
    %v78 = vsel %vm67, %v30, 0
    %v81 = vsel %vm67, %v31, 0
    %v84 = vsel %vm67, %v32, 0
    %v87 = vsel %vm67, %v33, 0
    %v90 = vsel %vm67, %v34, 0
    %v93 = vsel %vm67, %v35, 0
    %v96 = vsel %vm67, %v36, 0
    %v99 = vsel %vm67, %v37, 0
    %v102 = vsel %vm67, %v38, 0
    %v105 = vsel %vm67, %v39, 0
    %v108 = vsel %vm67, %v40, 0
    %v111 = vsel %vm67, %v41, 0
    %v114 = vsel %vm67, %v42, 0
    %v117 = vsel %vm67, %v43, 0
    %v120 = vsel %vm67, %v44, 0
    %v123 = vsel %vm67, %v45, 0
    %v126 = vsel %vm67, %v46, 0
    %v129 = vsel %vm67, %v47, 0
    %v132 = vsel %vm67, %v48, 0
    %v135 = vsel %vm67, %v49, 0
    %v138 = vsel %vm67, %v50, 0
    %v141 = vsel %vm67, %v51, 0
    %v144 = vsel %vm67, %v52, 0
    %v147 = vsel %vm67, %v53, 0
    %v150 = vsel %vm67, %v54, 0
    %v153 = vsel %vm67, %v55, 0
    %v156 = vsel %vm67, %v56, 0
    %v159 = vsel %vm67, %v57, 0
    %v162 = vsel %vm67, %v58, 0
    %vm164 = vcmask 1043456
    %v166 = vsel %vm164, %v59, 0
    %168 = vmatprep.subr.mxu0 0.0
    %169 = vmatpush1.msra.mxu0 %v166
    %170 = vmatprep.subr.mxu0 0.0
    %171 = vmatpush1.msra.mxu0 0.0
    %172 = vmatprep.subr.mxu0 0.0
    %173 = vmatpush1.msra.mxu0 0.0
    %174 = vmatprep.subr.mxu0 0.0
    %175 = vmatpush1.msra.mxu0 0.0
    %176 = vmatprep.subr.mxu0 0.0
    %177 = vmatpush1.msra.mxu0 0.0
    %178 = vmatprep.subr.mxu0 0.0
    %179 = vmatpush1.msra.mxu0 0.0
    %180 = vmatprep.subr.mxu0 0.0
    %181 = vmatpush1.msra.mxu0 0.0
    %182 = vmatprep.subr.mxu0 0.0
    %183 = vmatpush1.msra.mxu0 0.0
    %184 = vmatprep.subr.mxu0 0.0
    %185 = vmatpush1.msra.mxu0 0.0
    %186 = vmatprep.subr.mxu0 0.0
    %187 = vmatpush1.msra.mxu0 0.0
    %188 = vmatprep.subr.mxu0 0.0
    %189 = vmatpush1.msra.mxu0 0.0
    %190 = vmatprep.subr.mxu0 0.0
    %191 = vmatpush1.msra.mxu0 0.0
    %192 = vmatprep.subr.mxu0 0.0
    %193 = vmatpush1.msra.mxu0 0.0
    %194 = vmatprep.subr.mxu0 0.0
    %195 = vmatpush1.msra.mxu0 0.0
    %196 = vmatprep.subr.mxu0 0.0
    %197 = vmatpush1.msra.mxu0 0.0
    %198 = vmatprep.subr.mxu0 0.0
    %199 = vmatpush1.msra.mxu0 0.0
    %200 = vmatprep.subr.mxu0 0.0
    %201 = vmatpush1.msra.mxu0 0.0
    %202 = vmatprep.subr.mxu0 0.0
    %203 = vmatpush1.msra.mxu0 0.0
    %204 = vmatprep.subr.mxu0 0.0
    %205 = vmatpush1.msra.mxu0 0.0
    %206 = vmatprep.subr.mxu0 0.0
    %207 = vmatpush1.msra.mxu0 0.0
    %208 = vmatprep.subr.mxu0 0.0
    %209 = vmatpush1.msra.mxu0 0.0
    %210 = vmatprep.subr.mxu0 0.0
    %211 = vmatpush1.msra.mxu0 0.0
    %212 = vmatprep.subr.mxu0 0.0
    %213 = vmatpush1.msra.mxu0 0.0
    %214 = vmatprep.subr.mxu0 0.0
    %215 = vmatpush1.msra.mxu0 0.0
    %216 = vmatprep.subr.mxu0 0.0
    %217 = vmatpush1.msra.mxu0 0.0
    %218 = vmatprep.subr.mxu0 0.0
    %219 = vmatpush1.msra.mxu0 0.0
    %220 = vmatprep.subr.mxu0 0.0
    %221 = vmatpush1.msra.mxu0 0.0
    %222 = vmatprep.subr.mxu0 0.0
    %223 = vmatpush1.msra.mxu0 0.0
    %224 = vmatprep.subr.mxu0 0.0
    %225 = vmatpush1.msra.mxu0 0.0
    %226 = vmatprep.subr.mxu0 0.0
    %227 = vmatpush1.msra.mxu0 0.0
    %228 = vmatprep.subr.mxu0 0.0
    %229 = vmatpush1.msra.mxu0 0.0
    %230 = vmatprep.subr.mxu0 0.0
    %231 = vmatpush1.msra.mxu0 0.0
    %232 = vmatprep.mubr.f32.mxu0 0.0
    %233 = vmatmul.mubr.f32.gmra.mrb[0].mxu0 %v69
    %v234 = vpop.f32.mrb[0].mxu0
    %v235 = vadd.f32 %v65, %v234
    %v236 = vpop.f32.mrb[0].mxu0
    %237 = vmatprep.mubr.f32.mxu0 0.0
    %238 = vmatmul.mubr.f32.gmra.mrb[0].mxu0 %v72
    %v239 = vpop.f32.mrb[0].mxu0
    %v240 = vadd.f32 %v65, %v239
    %v241 = vpop.f32.mrb[0].mxu0
    %242 = vmatprep.mubr.f32.mxu0 0.0
    %243 = vmatmul.mubr.f32.gmra.mrb[0].mxu0 %v75
    %v244 = vpop.f32.mrb[0].mxu0
    %v245 = vadd.f32 %v65, %v244
    %v246 = vpop.f32.mrb[0].mxu0
    %247 = vmatprep.mubr.f32.mxu0 0.0
    %248 = vmatmul.mubr.f32.gmra.mrb[0].mxu0 %v78
    %v249 = vpop.f32.mrb[0].mxu0
    %v250 = vadd.f32 %v65, %v249
    %v251 = vpop.f32.mrb[0].mxu0
    %252 = vmatprep.mubr.f32.mxu0 0.0
    %253 = vmatmul.mubr.f32.gmra.mrb[0].mxu0 %v81
    %v254 = vpop.f32.mrb[0].mxu0
    %v255 = vadd.f32 %v65, %v254
    %v256 = vpop.f32.mrb[0].mxu0
    %257 = vmatprep.mubr.f32.mxu0 0.0
    %258 = vmatmul.mubr.f32.gmra.mrb[0].mxu0 %v84
    %v259 = vpop.f32.mrb[0].mxu0
    %v260 = vadd.f32 %v65, %v259
    %v261 = vpop.f32.mrb[0].mxu0
    %262 = vmatprep.mubr.f32.mxu0 0.0
    %263 = vmatmul.mubr.f32.gmra.mrb[0].mxu0 %v87
    %v264 = vpop.f32.mrb[0].mxu0
    %v265 = vadd.f32 %v65, %v264
    %v266 = vpop.f32.mrb[0].mxu0
    %267 = vmatprep.mubr.f32.mxu0 0.0
    %268 = vmatmul.mubr.f32.gmra.mrb[0].mxu0 %v90
    %v269 = vpop.f32.mrb[0].mxu0
    %v270 = vadd.f32 %v65, %v269
    %v271 = vpop.f32.mrb[0].mxu0
    %272 = vmatprep.mubr.f32.mxu0 0.0
    %273 = vmatmul.mubr.f32.gmra.mrb[0].mxu0 %v93
    %v274 = vpop.f32.mrb[0].mxu0
    %v275 = vadd.f32 %v65, %v274
    %v276 = vpop.f32.mrb[0].mxu0
    %277 = vmatprep.mubr.f32.mxu0 0.0
    %278 = vmatmul.mubr.f32.gmra.mrb[0].mxu0 %v96
    %v279 = vpop.f32.mrb[0].mxu0
    %v280 = vadd.f32 %v65, %v279
    %v281 = vpop.f32.mrb[0].mxu0
    %282 = vmatprep.mubr.f32.mxu0 0.0
    %283 = vmatmul.mubr.f32.gmra.mrb[0].mxu0 %v99
    %v284 = vpop.f32.mrb[0].mxu0
    %v285 = vadd.f32 %v65, %v284
    %v286 = vpop.f32.mrb[0].mxu0
    %287 = vmatprep.mubr.f32.mxu0 0.0
    %288 = vmatmul.mubr.f32.gmra.mrb[0].mxu0 %v102
    %v289 = vpop.f32.mrb[0].mxu0
    %v290 = vadd.f32 %v65, %v289
    %v291 = vpop.f32.mrb[0].mxu0
    %292 = vmatprep.mubr.f32.mxu0 0.0
    %293 = vmatmul.mubr.f32.gmra.mrb[0].mxu0 %v105
    %v294 = vpop.f32.mrb[0].mxu0
    %v295 = vadd.f32 %v65, %v294
    %v296 = vpop.f32.mrb[0].mxu0
    %297 = vmatprep.mubr.f32.mxu0 0.0
    %298 = vmatmul.mubr.f32.gmra.mrb[0].mxu0 %v108
    %v299 = vpop.f32.mrb[0].mxu0
    %v300 = vadd.f32 %v65, %v299
    %v301 = vpop.f32.mrb[0].mxu0
    %302 = vmatprep.mubr.f32.mxu0 0.0
    %303 = vmatmul.mubr.f32.gmra.mrb[0].mxu0 %v111
    %v304 = vpop.f32.mrb[0].mxu0
    %v305 = vadd.f32 %v65, %v304
    %v306 = vpop.f32.mrb[0].mxu0
    %307 = vmatprep.mubr.f32.mxu0 0.0
    %308 = vmatmul.mubr.f32.gmra.mrb[0].mxu0 %v114
    %v309 = vpop.f32.mrb[0].mxu0
    %v310 = vadd.f32 %v65, %v309
    %v311 = vpop.f32.mrb[0].mxu0
    %312 = vmatprep.mubr.f32.mxu0 0.0
    %313 = vmatmul.mubr.f32.gmra.mrb[0].mxu0 %v117
    %v314 = vpop.f32.mrb[0].mxu0
    %v315 = vadd.f32 %v65, %v314
    %v316 = vpop.f32.mrb[0].mxu0
    %317 = vmatprep.mubr.f32.mxu0 0.0
    %318 = vmatmul.mubr.f32.gmra.mrb[0].mxu0 %v120
    %v319 = vpop.f32.mrb[0].mxu0
    %v320 = vadd.f32 %v65, %v319
    %v321 = vpop.f32.mrb[0].mxu0
    %322 = vmatprep.mubr.f32.mxu0 0.0
    %323 = vmatmul.mubr.f32.gmra.mrb[0].mxu0 %v123
    %v324 = vpop.f32.mrb[0].mxu0
    %v325 = vadd.f32 %v65, %v324
    %v326 = vpop.f32.mrb[0].mxu0
    %327 = vmatprep.mubr.f32.mxu0 0.0
    %328 = vmatmul.mubr.f32.gmra.mrb[0].mxu0 %v126
    %v329 = vpop.f32.mrb[0].mxu0
    %v330 = vadd.f32 %v65, %v329
    %v331 = vpop.f32.mrb[0].mxu0
    %332 = vmatprep.mubr.f32.mxu0 0.0
    %333 = vmatmul.mubr.f32.gmra.mrb[0].mxu0 %v129
    %v334 = vpop.f32.mrb[0].mxu0
    %v335 = vadd.f32 %v65, %v334
    %v336 = vpop.f32.mrb[0].mxu0
    %337 = vmatprep.mubr.f32.mxu0 0.0
    %338 = vmatmul.mubr.f32.gmra.mrb[0].mxu0 %v132
    %v339 = vpop.f32.mrb[0].mxu0
    %v340 = vadd.f32 %v65, %v339
    %v341 = vpop.f32.mrb[0].mxu0
    %342 = vmatprep.mubr.f32.mxu0 0.0
    %343 = vmatmul.mubr.f32.gmra.mrb[0].mxu0 %v135
    %v344 = vpop.f32.mrb[0].mxu0
    %v345 = vadd.f32 %v65, %v344
    %v346 = vpop.f32.mrb[0].mxu0
    %347 = vmatprep.mubr.f32.mxu0 0.0
    %348 = vmatmul.mubr.f32.gmra.mrb[0].mxu0 %v138
    %v349 = vpop.f32.mrb[0].mxu0
    %v350 = vadd.f32 %v65, %v349
    %v351 = vpop.f32.mrb[0].mxu0
    %352 = vmatprep.mubr.f32.mxu0 0.0
    %353 = vmatmul.mubr.f32.gmra.mrb[0].mxu0 %v141
    %v354 = vpop.f32.mrb[0].mxu0
    %v355 = vadd.f32 %v65, %v354
    %v356 = vpop.f32.mrb[0].mxu0
    %357 = vmatprep.mubr.f32.mxu0 0.0
    %358 = vmatmul.mubr.f32.gmra.mrb[0].mxu0 %v144
    %v359 = vpop.f32.mrb[0].mxu0
    %v360 = vadd.f32 %v65, %v359
    %v361 = vpop.f32.mrb[0].mxu0
    %362 = vmatprep.mubr.f32.mxu0 0.0
    %363 = vmatmul.mubr.f32.gmra.mrb[0].mxu0 %v147
    %v364 = vpop.f32.mrb[0].mxu0
    %v365 = vadd.f32 %v65, %v364
    %v366 = vpop.f32.mrb[0].mxu0
    %367 = vmatprep.mubr.f32.mxu0 0.0
    %368 = vmatmul.mubr.f32.gmra.mrb[0].mxu0 %v150
    %v369 = vpop.f32.mrb[0].mxu0
    %v370 = vadd.f32 %v65, %v369
    %v371 = vpop.f32.mrb[0].mxu0
    %372 = vmatprep.mubr.f32.mxu0 0.0
    %373 = vmatmul.mubr.f32.gmra.mrb[0].mxu0 %v153
    %v374 = vpop.f32.mrb[0].mxu0
    %v375 = vadd.f32 %v65, %v374
    %v376 = vpop.f32.mrb[0].mxu0
    %377 = vmatprep.mubr.f32.mxu0 0.0
    %378 = vmatmul.mubr.f32.gmra.mrb[0].mxu0 %v156
    %v379 = vpop.f32.mrb[0].mxu0
    %v380 = vadd.f32 %v65, %v379
    %v381 = vpop.f32.mrb[0].mxu0
    %382 = vmatprep.mubr.f32.mxu0 0.0
    %383 = vmatmul.mubr.f32.gmra.mrb[0].mxu0 %v159
    %v384 = vpop.f32.mrb[0].mxu0
    %v385 = vadd.f32 %v65, %v384
    %v386 = vpop.f32.mrb[0].mxu0
    %387 = vmatprep.mubr.f32.mxu0 0.0
    %388 = vmatmul.mubr.f32.gmra.mrb[0].mxu0 %v162
    %v389 = vpop.f32.mrb[0].mxu0
    %v390 = vadd.f32 %v65, %v389
    %v391 = vpop.f32.mrb[0].mxu0
    %392 = vdwg.mxu0
    %v393 = vmax.f32 %v235, 0.0
    %v394 = vmax.f32 %v240, 0.0
    %v395 = vmax.f32 %v245, 0.0
    %v396 = vmax.f32 %v250, 0.0
    %v397 = vmax.f32 %v255, 0.0
    %v398 = vmax.f32 %v260, 0.0
    %v399 = vmax.f32 %v265, 0.0
    %v400 = vmax.f32 %v270, 0.0
    %v401 = vmax.f32 %v275, 0.0
    %v402 = vmax.f32 %v280, 0.0
    %v403 = vmax.f32 %v285, 0.0
    %v404 = vmax.f32 %v290, 0.0
    %v405 = vmax.f32 %v295, 0.0
    %v406 = vmax.f32 %v300, 0.0
    %v407 = vmax.f32 %v305, 0.0
    %v408 = vmax.f32 %v310, 0.0
    %v409 = vmax.f32 %v315, 0.0
    %v410 = vmax.f32 %v320, 0.0
    %v411 = vmax.f32 %v325, 0.0
    %v412 = vmax.f32 %v330, 0.0
    %v413 = vmax.f32 %v335, 0.0
    %v414 = vmax.f32 %v340, 0.0
    %v415 = vmax.f32 %v345, 0.0
    %v416 = vmax.f32 %v350, 0.0
    %v417 = vmax.f32 %v355, 0.0
    %v418 = vmax.f32 %v360, 0.0
    %v419 = vmax.f32 %v365, 0.0
    %v420 = vmax.f32 %v370, 0.0
    %v421 = vmax.f32 %v375, 0.0
    %v422 = vmax.f32 %v380, 0.0
    %v423 = vmax.f32 %v385, 0.0
    %v424 = vmax.f32 %v390, 0.0
    %v425 = vld [vmem:[%s3] sm:$0xff]
    %v426 = vld [vmem:[%s3 + $0x8] sm:$0xff]
    %v427 = vld [vmem:[%s4] sm:$0x1]
    %v429 = vlaneseq
    %v430 = vshrl.u32 %v429, 7
    %v431 = vsub.s32 0, %v430
    %v432 = vrot.slane %v427, %v431
    %vm434 = vcmask 130048
    %v436 = vsel %vm434, %v393, 0
    %v439 = vsel %vm434, %v394, 0
    %v442 = vsel %vm434, %v395, 0
    %v445 = vsel %vm434, %v396, 0
    %v448 = vsel %vm434, %v397, 0
    %v451 = vsel %vm434, %v398, 0
    %v454 = vsel %vm434, %v399, 0
    %v457 = vsel %vm434, %v400, 0
    %v460 = vsel %vm434, %v401, 0
    %v463 = vsel %vm434, %v402, 0
    %v466 = vsel %vm434, %v403, 0
    %v469 = vsel %vm434, %v404, 0
    %v472 = vsel %vm434, %v405, 0
    %v475 = vsel %vm434, %v406, 0
    %v478 = vsel %vm434, %v407, 0
    %v481 = vsel %vm434, %v408, 0
    %v484 = vsel %vm434, %v409, 0
    %v487 = vsel %vm434, %v410, 0
    %v490 = vsel %vm434, %v411, 0
    %v493 = vsel %vm434, %v412, 0
    %v496 = vsel %vm434, %v413, 0
    %v499 = vsel %vm434, %v414, 0
    %v502 = vsel %vm434, %v415, 0
    %v505 = vsel %vm434, %v416, 0
    %v508 = vsel %vm434, %v417, 0
    %v511 = vsel %vm434, %v418, 0
    %v514 = vsel %vm434, %v419, 0
    %v517 = vsel %vm434, %v420, 0
    %v520 = vsel %vm434, %v421, 0
    %v523 = vsel %vm434, %v422, 0
    %v526 = vsel %vm434, %v423, 0
    %v529 = vsel %vm434, %v424, 0
    %531 = vmatprep.subr.mxu0 0.0
    %532 = vmatpush1.msra.mxu0 %v425
    %533 = vmatprep.subr.mxu0 0.0
    %534 = vmatpush1.msra.mxu0 %v426
    %535 = vmatprep.subr.mxu0 0.0
    %536 = vmatpush1.msra.mxu0 0.0
    %537 = vmatprep.subr.mxu0 0.0
    %538 = vmatpush1.msra.mxu0 0.0
    %539 = vmatprep.subr.mxu0 0.0
    %540 = vmatpush1.msra.mxu0 0.0
    %541 = vmatprep.subr.mxu0 0.0
    %542 = vmatpush1.msra.mxu0 0.0
    %543 = vmatprep.subr.mxu0 0.0
    %544 = vmatpush1.msra.mxu0 0.0
    %545 = vmatprep.subr.mxu0 0.0
    %546 = vmatpush1.msra.mxu0 0.0
    %547 = vmatprep.subr.mxu0 0.0
    %548 = vmatpush1.msra.mxu0 0.0
    %549 = vmatprep.subr.mxu0 0.0
    %550 = vmatpush1.msra.mxu0 0.0
    %551 = vmatprep.subr.mxu0 0.0
    %552 = vmatpush1.msra.mxu0 0.0
    %553 = vmatprep.subr.mxu0 0.0
    %554 = vmatpush1.msra.mxu0 0.0
    %555 = vmatprep.subr.mxu0 0.0
    %556 = vmatpush1.msra.mxu0 0.0
    %557 = vmatprep.subr.mxu0 0.0
    %558 = vmatpush1.msra.mxu0 0.0
    %559 = vmatprep.subr.mxu0 0.0
    %560 = vmatpush1.msra.mxu0 0.0
    %561 = vmatprep.subr.mxu0 0.0
    %562 = vmatpush1.msra.mxu0 0.0
    %563 = vmatprep.subr.mxu0 0.0
    %564 = vmatpush1.msra.mxu0 0.0
    %565 = vmatprep.subr.mxu0 0.0
    %566 = vmatpush1.msra.mxu0 0.0
    %567 = vmatprep.subr.mxu0 0.0
    %568 = vmatpush1.msra.mxu0 0.0
    %569 = vmatprep.subr.mxu0 0.0
    %570 = vmatpush1.msra.mxu0 0.0
    %571 = vmatprep.subr.mxu0 0.0
    %572 = vmatpush1.msra.mxu0 0.0
    %573 = vmatprep.subr.mxu0 0.0
    %574 = vmatpush1.msra.mxu0 0.0
    %575 = vmatprep.subr.mxu0 0.0
    %576 = vmatpush1.msra.mxu0 0.0
    %577 = vmatprep.subr.mxu0 0.0
    %578 = vmatpush1.msra.mxu0 0.0
    %579 = vmatprep.subr.mxu0 0.0
    %580 = vmatpush1.msra.mxu0 0.0
    %581 = vmatprep.subr.mxu0 0.0
    %582 = vmatpush1.msra.mxu0 0.0
    %583 = vmatprep.subr.mxu0 0.0
    %584 = vmatpush1.msra.mxu0 0.0
    %585 = vmatprep.subr.mxu0 0.0
    %586 = vmatpush1.msra.mxu0 0.0
    %587 = vmatprep.subr.mxu0 0.0
    %588 = vmatpush1.msra.mxu0 0.0
    %589 = vmatprep.subr.mxu0 0.0
    %590 = vmatpush1.msra.mxu0 0.0
    %591 = vmatprep.subr.mxu0 0.0
    %592 = vmatpush1.msra.mxu0 0.0
    %593 = vmatprep.subr.mxu0 0.0
    %594 = vmatpush1.msra.mxu0 0.0
    %595 = vmatprep.mubr.f32.mxu0 0.0
    %596 = vmatmul.mubr.f32.gmra.mrb[0].mxu0 %v436
    %v597 = vpop.f32.mrb[0].mxu0
    %v598 = vadd.f32 %v432, %v597
    %v599 = vpop.f32.mrb[0].mxu0
    %600 = vmatprep.mubr.f32.mxu0 0.0
    %601 = vmatmul.mubr.f32.gmra.mrb[0].mxu0 %v439
    %v602 = vpop.f32.mrb[0].mxu0
    %v603 = vadd.f32 %v432, %v602
    %v604 = vpop.f32.mrb[0].mxu0
    %605 = vmatprep.mubr.f32.mxu0 0.0
    %606 = vmatmul.mubr.f32.gmra.mrb[0].mxu0 %v442
    %v607 = vpop.f32.mrb[0].mxu0
    %v608 = vadd.f32 %v432, %v607
    %v609 = vpop.f32.mrb[0].mxu0
    %610 = vmatprep.mubr.f32.mxu0 0.0
    %611 = vmatmul.mubr.f32.gmra.mrb[0].mxu0 %v445
    %v612 = vpop.f32.mrb[0].mxu0
    %v613 = vadd.f32 %v432, %v612
    %v614 = vpop.f32.mrb[0].mxu0
    %615 = vmatprep.mubr.f32.mxu0 0.0
    %616 = vmatmul.mubr.f32.gmra.mrb[0].mxu0 %v448
    %v617 = vpop.f32.mrb[0].mxu0
    %v618 = vadd.f32 %v432, %v617
    %v619 = vpop.f32.mrb[0].mxu0
    %620 = vmatprep.mubr.f32.mxu0 0.0
    %621 = vmatmul.mubr.f32.gmra.mrb[0].mxu0 %v451
    %v622 = vpop.f32.mrb[0].mxu0
    %v623 = vadd.f32 %v432, %v622
    %v624 = vpop.f32.mrb[0].mxu0
    %625 = vmatprep.mubr.f32.mxu0 0.0
    %626 = vmatmul.mubr.f32.gmra.mrb[0].mxu0 %v454
    %v627 = vpop.f32.mrb[0].mxu0
    %v628 = vadd.f32 %v432, %v627
    %v629 = vpop.f32.mrb[0].mxu0
    %630 = vmatprep.mubr.f32.mxu0 0.0
    %631 = vmatmul.mubr.f32.gmra.mrb[0].mxu0 %v457
    %v632 = vpop.f32.mrb[0].mxu0
    %v633 = vadd.f32 %v432, %v632
    %v634 = vpop.f32.mrb[0].mxu0
    %635 = vmatprep.mubr.f32.mxu0 0.0
    %636 = vmatmul.mubr.f32.gmra.mrb[0].mxu0 %v460
    %v637 = vpop.f32.mrb[0].mxu0
    %v638 = vadd.f32 %v432, %v637
    %v639 = vpop.f32.mrb[0].mxu0
    %640 = vmatprep.mubr.f32.mxu0 0.0
    %641 = vmatmul.mubr.f32.gmra.mrb[0].mxu0 %v463
    %v642 = vpop.f32.mrb[0].mxu0
    %v643 = vadd.f32 %v432, %v642
    %v644 = vpop.f32.mrb[0].mxu0
    %645 = vmatprep.mubr.f32.mxu0 0.0
    %646 = vmatmul.mubr.f32.gmra.mrb[0].mxu0 %v466
    %v647 = vpop.f32.mrb[0].mxu0
    %v648 = vadd.f32 %v432, %v647
    %v649 = vpop.f32.mrb[0].mxu0
    %650 = vmatprep.mubr.f32.mxu0 0.0
    %651 = vmatmul.mubr.f32.gmra.mrb[0].mxu0 %v469
    %v652 = vpop.f32.mrb[0].mxu0
    %v653 = vadd.f32 %v432, %v652
    %v654 = vpop.f32.mrb[0].mxu0
    %655 = vmatprep.mubr.f32.mxu0 0.0
    %656 = vmatmul.mubr.f32.gmra.mrb[0].mxu0 %v472
    %v657 = vpop.f32.mrb[0].mxu0
    %v658 = vadd.f32 %v432, %v657
    %v659 = vpop.f32.mrb[0].mxu0
    %660 = vmatprep.mubr.f32.mxu0 0.0
    %661 = vmatmul.mubr.f32.gmra.mrb[0].mxu0 %v475
    %v662 = vpop.f32.mrb[0].mxu0
    %v663 = vadd.f32 %v432, %v662
    %v664 = vpop.f32.mrb[0].mxu0
    %665 = vmatprep.mubr.f32.mxu0 0.0
    %666 = vmatmul.mubr.f32.gmra.mrb[0].mxu0 %v478
    %v667 = vpop.f32.mrb[0].mxu0
    %v668 = vadd.f32 %v432, %v667
    %v669 = vpop.f32.mrb[0].mxu0
    %670 = vmatprep.mubr.f32.mxu0 0.0
    %671 = vmatmul.mubr.f32.gmra.mrb[0].mxu0 %v481
    %v672 = vpop.f32.mrb[0].mxu0
    %v673 = vadd.f32 %v432, %v672
    %v674 = vpop.f32.mrb[0].mxu0
    %675 = vmatprep.mubr.f32.mxu0 0.0
    %676 = vmatmul.mubr.f32.gmra.mrb[0].mxu0 %v484
    %v677 = vpop.f32.mrb[0].mxu0
    %v678 = vadd.f32 %v432, %v677
    %v679 = vpop.f32.mrb[0].mxu0
    %680 = vmatprep.mubr.f32.mxu0 0.0
    %681 = vmatmul.mubr.f32.gmra.mrb[0].mxu0 %v487
    %v682 = vpop.f32.mrb[0].mxu0
    %v683 = vadd.f32 %v432, %v682
    %v684 = vpop.f32.mrb[0].mxu0
    %685 = vmatprep.mubr.f32.mxu0 0.0
    %686 = vmatmul.mubr.f32.gmra.mrb[0].mxu0 %v490
    %v687 = vpop.f32.mrb[0].mxu0
    %v688 = vadd.f32 %v432, %v687
    %v689 = vpop.f32.mrb[0].mxu0
    %690 = vmatprep.mubr.f32.mxu0 0.0
    %691 = vmatmul.mubr.f32.gmra.mrb[0].mxu0 %v493
    %v692 = vpop.f32.mrb[0].mxu0
    %v693 = vadd.f32 %v432, %v692
    %v694 = vpop.f32.mrb[0].mxu0
    %695 = vmatprep.mubr.f32.mxu0 0.0
    %696 = vmatmul.mubr.f32.gmra.mrb[0].mxu0 %v496
    %v697 = vpop.f32.mrb[0].mxu0
    %v698 = vadd.f32 %v432, %v697
    %v699 = vpop.f32.mrb[0].mxu0
    %700 = vmatprep.mubr.f32.mxu0 0.0
    %701 = vmatmul.mubr.f32.gmra.mrb[0].mxu0 %v499
    %v702 = vpop.f32.mrb[0].mxu0
    %v703 = vadd.f32 %v432, %v702
    %v704 = vpop.f32.mrb[0].mxu0
    %705 = vmatprep.mubr.f32.mxu0 0.0
    %706 = vmatmul.mubr.f32.gmra.mrb[0].mxu0 %v502
    %v707 = vpop.f32.mrb[0].mxu0
    %v708 = vadd.f32 %v432, %v707
    %v709 = vpop.f32.mrb[0].mxu0
    %710 = vmatprep.mubr.f32.mxu0 0.0
    %711 = vmatmul.mubr.f32.gmra.mrb[0].mxu0 %v505
    %v712 = vpop.f32.mrb[0].mxu0
    %v713 = vadd.f32 %v432, %v712
    %v714 = vpop.f32.mrb[0].mxu0
    %715 = vmatprep.mubr.f32.mxu0 0.0
    %716 = vmatmul.mubr.f32.gmra.mrb[0].mxu0 %v508
    %v717 = vpop.f32.mrb[0].mxu0
    %v718 = vadd.f32 %v432, %v717
    %v719 = vpop.f32.mrb[0].mxu0
    %720 = vmatprep.mubr.f32.mxu0 0.0
    %721 = vmatmul.mubr.f32.gmra.mrb[0].mxu0 %v511
    %v722 = vpop.f32.mrb[0].mxu0
    %v723 = vadd.f32 %v432, %v722
    %v724 = vpop.f32.mrb[0].mxu0
    %725 = vmatprep.mubr.f32.mxu0 0.0
    %726 = vmatmul.mubr.f32.gmra.mrb[0].mxu0 %v514
    %v727 = vpop.f32.mrb[0].mxu0
    %v728 = vadd.f32 %v432, %v727
    %v729 = vpop.f32.mrb[0].mxu0
    %730 = vmatprep.mubr.f32.mxu0 0.0
    %731 = vmatmul.mubr.f32.gmra.mrb[0].mxu0 %v517
    %v732 = vpop.f32.mrb[0].mxu0
    %v733 = vadd.f32 %v432, %v732
    %v734 = vpop.f32.mrb[0].mxu0
    %735 = vmatprep.mubr.f32.mxu0 0.0
    %736 = vmatmul.mubr.f32.gmra.mrb[0].mxu0 %v520
    %v737 = vpop.f32.mrb[0].mxu0
    %v738 = vadd.f32 %v432, %v737
    %v739 = vpop.f32.mrb[0].mxu0
    %740 = vmatprep.mubr.f32.mxu0 0.0
    %741 = vmatmul.mubr.f32.gmra.mrb[0].mxu0 %v523
    %v742 = vpop.f32.mrb[0].mxu0
    %v743 = vadd.f32 %v432, %v742
    %v744 = vpop.f32.mrb[0].mxu0
    %745 = vmatprep.mubr.f32.mxu0 0.0
    %746 = vmatmul.mubr.f32.gmra.mrb[0].mxu0 %v526
    %v747 = vpop.f32.mrb[0].mxu0
    %v748 = vadd.f32 %v432, %v747
    %v749 = vpop.f32.mrb[0].mxu0
    %750 = vmatprep.mubr.f32.mxu0 0.0
    %751 = vmatmul.mubr.f32.gmra.mrb[0].mxu0 %v529
    %v752 = vpop.f32.mrb[0].mxu0
    %v753 = vadd.f32 %v432, %v752
    %v754 = vpop.f32.mrb[0].mxu0
    %755 = vdwg.mxu0
    %v756 = vmax.f32 %v598, 0.0
    %v757 = vmax.f32 %v603, 0.0
    %v758 = vmax.f32 %v608, 0.0
    %v759 = vmax.f32 %v613, 0.0
    %v760 = vmax.f32 %v618, 0.0
    %v761 = vmax.f32 %v623, 0.0
    %v762 = vmax.f32 %v628, 0.0
    %v763 = vmax.f32 %v633, 0.0
    %v764 = vmax.f32 %v638, 0.0
    %v765 = vmax.f32 %v643, 0.0
    %v766 = vmax.f32 %v648, 0.0
    %v767 = vmax.f32 %v653, 0.0
    %v768 = vmax.f32 %v658, 0.0
    %v769 = vmax.f32 %v663, 0.0
    %v770 = vmax.f32 %v668, 0.0
    %v771 = vmax.f32 %v673, 0.0
    %v772 = vmax.f32 %v678, 0.0
    %v773 = vmax.f32 %v683, 0.0
    %v774 = vmax.f32 %v688, 0.0
    %v775 = vmax.f32 %v693, 0.0
    %v776 = vmax.f32 %v698, 0.0
    %v777 = vmax.f32 %v703, 0.0
    %v778 = vmax.f32 %v708, 0.0
    %v779 = vmax.f32 %v713, 0.0
    %v780 = vmax.f32 %v718, 0.0
    %v781 = vmax.f32 %v723, 0.0
    %v782 = vmax.f32 %v728, 0.0
    %v783 = vmax.f32 %v733, 0.0
    %v784 = vmax.f32 %v738, 0.0
    %v785 = vmax.f32 %v743, 0.0
    %v786 = vmax.f32 %v748, 0.0
    %v787 = vmax.f32 %v753, 0.0
    %v788 = vld [vmem:[%s5] sm:$0xff]
    %v789 = vld [vmem:[%s5 + $0x8] sm:$0xff]
    %v790 = vld [vmem:[%s5 + $0x10] sm:$0xff]
    %v791 = vld [vmem:[%s5 + $0x18] sm:$0xff]
    %v792 = vld [vmem:[%s6] sm:$0x1]
    %v794 = vlaneseq
    %v795 = vshrl.u32 %v794, 7
    %v796 = vsub.s32 0, %v795
    %v797 = vrot.slane %v792, %v796
    %vm799 = vcmask 261120
    %v801 = vsel %vm799, %v756, 0
    %v804 = vsel %vm799, %v757, 0
    %v807 = vsel %vm799, %v758, 0
    %v810 = vsel %vm799, %v759, 0
    %v813 = vsel %vm799, %v760, 0
    %v816 = vsel %vm799, %v761, 0
    %v819 = vsel %vm799, %v762, 0
    %v822 = vsel %vm799, %v763, 0
    %v825 = vsel %vm799, %v764, 0
    %v828 = vsel %vm799, %v765, 0
    %v831 = vsel %vm799, %v766, 0
    %v834 = vsel %vm799, %v767, 0
    %v837 = vsel %vm799, %v768, 0
    %v840 = vsel %vm799, %v769, 0
    %v843 = vsel %vm799, %v770, 0
    %v846 = vsel %vm799, %v771, 0
    %v849 = vsel %vm799, %v772, 0
    %v852 = vsel %vm799, %v773, 0
    %v855 = vsel %vm799, %v774, 0
    %v858 = vsel %vm799, %v775, 0
    %v861 = vsel %vm799, %v776, 0
    %v864 = vsel %vm799, %v777, 0
    %v867 = vsel %vm799, %v778, 0
    %v870 = vsel %vm799, %v779, 0
    %v873 = vsel %vm799, %v780, 0
    %v876 = vsel %vm799, %v781, 0
    %v879 = vsel %vm799, %v782, 0
    %v882 = vsel %vm799, %v783, 0
    %v885 = vsel %vm799, %v784, 0
    %v888 = vsel %vm799, %v785, 0
    %v891 = vsel %vm799, %v786, 0
    %v894 = vsel %vm799, %v787, 0
    %896 = vmatprep.subr.mxu0 0.0
    %897 = vmatpush1.msra.mxu0 %v788
    %898 = vmatprep.subr.mxu0 0.0
    %899 = vmatpush1.msra.mxu0 %v789
    %900 = vmatprep.subr.mxu0 0.0
    %901 = vmatpush1.msra.mxu0 %v790
    %902 = vmatprep.subr.mxu0 0.0
    %903 = vmatpush1.msra.mxu0 %v791
    %904 = vmatprep.subr.mxu0 0.0
    %905 = vmatpush1.msra.mxu0 0.0
    %906 = vmatprep.subr.mxu0 0.0
    %907 = vmatpush1.msra.mxu0 0.0
    %908 = vmatprep.subr.mxu0 0.0
    %909 = vmatpush1.msra.mxu0 0.0
    %910 = vmatprep.subr.mxu0 0.0
    %911 = vmatpush1.msra.mxu0 0.0
    %912 = vmatprep.subr.mxu0 0.0
    %913 = vmatpush1.msra.mxu0 0.0
    %914 = vmatprep.subr.mxu0 0.0
    %915 = vmatpush1.msra.mxu0 0.0
    %916 = vmatprep.subr.mxu0 0.0
    %917 = vmatpush1.msra.mxu0 0.0
    %918 = vmatprep.subr.mxu0 0.0
    %919 = vmatpush1.msra.mxu0 0.0
    %920 = vmatprep.subr.mxu0 0.0
    %921 = vmatpush1.msra.mxu0 0.0
    %922 = vmatprep.subr.mxu0 0.0
    %923 = vmatpush1.msra.mxu0 0.0
    %924 = vmatprep.subr.mxu0 0.0
    %925 = vmatpush1.msra.mxu0 0.0
    %926 = vmatprep.subr.mxu0 0.0
    %927 = vmatpush1.msra.mxu0 0.0
    %928 = vmatprep.subr.mxu0 0.0
    %929 = vmatpush1.msra.mxu0 0.0
    %930 = vmatprep.subr.mxu0 0.0
    %931 = vmatpush1.msra.mxu0 0.0
    %932 = vmatprep.subr.mxu0 0.0
    %933 = vmatpush1.msra.mxu0 0.0
    %934 = vmatprep.subr.mxu0 0.0
    %935 = vmatpush1.msra.mxu0 0.0
    %936 = vmatprep.subr.mxu0 0.0
    %937 = vmatpush1.msra.mxu0 0.0
    %938 = vmatprep.subr.mxu0 0.0
    %939 = vmatpush1.msra.mxu0 0.0
    %940 = vmatprep.subr.mxu0 0.0
    %941 = vmatpush1.msra.mxu0 0.0
    %942 = vmatprep.subr.mxu0 0.0
    %943 = vmatpush1.msra.mxu0 0.0
    %944 = vmatprep.subr.mxu0 0.0
    %945 = vmatpush1.msra.mxu0 0.0
    %946 = vmatprep.subr.mxu0 0.0
    %947 = vmatpush1.msra.mxu0 0.0
    %948 = vmatprep.subr.mxu0 0.0
    %949 = vmatpush1.msra.mxu0 0.0
    %950 = vmatprep.subr.mxu0 0.0
    %951 = vmatpush1.msra.mxu0 0.0
    %952 = vmatprep.subr.mxu0 0.0
    %953 = vmatpush1.msra.mxu0 0.0
    %954 = vmatprep.subr.mxu0 0.0
    %955 = vmatpush1.msra.mxu0 0.0
    %956 = vmatprep.subr.mxu0 0.0
    %957 = vmatpush1.msra.mxu0 0.0
    %958 = vmatprep.subr.mxu0 0.0
    %959 = vmatpush1.msra.mxu0 0.0
    %960 = vmatprep.mubr.f32.mxu0 0.0
    %961 = vmatmul.mubr.f32.gmra.mrb[0].mxu0 %v801
    %v962 = vpop.f32.mrb[0].mxu0
    %v963 = vadd.f32 %v797, %v962
    %v964 = vpop.f32.mrb[0].mxu0
    %965 = vmatprep.mubr.f32.mxu0 0.0
    %966 = vmatmul.mubr.f32.gmra.mrb[0].mxu0 %v804
    %v967 = vpop.f32.mrb[0].mxu0
    %v968 = vadd.f32 %v797, %v967
    %v969 = vpop.f32.mrb[0].mxu0
    %970 = vmatprep.mubr.f32.mxu0 0.0
    %971 = vmatmul.mubr.f32.gmra.mrb[0].mxu0 %v807
    %v972 = vpop.f32.mrb[0].mxu0
    %v973 = vadd.f32 %v797, %v972
    %v974 = vpop.f32.mrb[0].mxu0
    %975 = vmatprep.mubr.f32.mxu0 0.0
    %976 = vmatmul.mubr.f32.gmra.mrb[0].mxu0 %v810
    %v977 = vpop.f32.mrb[0].mxu0
    %v978 = vadd.f32 %v797, %v977
    %v979 = vpop.f32.mrb[0].mxu0
    %980 = vmatprep.mubr.f32.mxu0 0.0
    %981 = vmatmul.mubr.f32.gmra.mrb[0].mxu0 %v813
    %v982 = vpop.f32.mrb[0].mxu0
    %v983 = vadd.f32 %v797, %v982
    %v984 = vpop.f32.mrb[0].mxu0
    %985 = vmatprep.mubr.f32.mxu0 0.0
    %986 = vmatmul.mubr.f32.gmra.mrb[0].mxu0 %v816
    %v987 = vpop.f32.mrb[0].mxu0
    %v988 = vadd.f32 %v797, %v987
    %v989 = vpop.f32.mrb[0].mxu0
    %990 = vmatprep.mubr.f32.mxu0 0.0
    %991 = vmatmul.mubr.f32.gmra.mrb[0].mxu0 %v819
    %v992 = vpop.f32.mrb[0].mxu0
    %v993 = vadd.f32 %v797, %v992
    %v994 = vpop.f32.mrb[0].mxu0
    %995 = vmatprep.mubr.f32.mxu0 0.0
    %996 = vmatmul.mubr.f32.gmra.mrb[0].mxu0 %v822
    %v997 = vpop.f32.mrb[0].mxu0
    %v998 = vadd.f32 %v797, %v997
    %v999 = vpop.f32.mrb[0].mxu0
    %1000 = vmatprep.mubr.f32.mxu0 0.0
    %1001 = vmatmul.mubr.f32.gmra.mrb[0].mxu0 %v825
    %v1002 = vpop.f32.mrb[0].mxu0
    %v1003 = vadd.f32 %v797, %v1002
    %v1004 = vpop.f32.mrb[0].mxu0
    %1005 = vmatprep.mubr.f32.mxu0 0.0
    %1006 = vmatmul.mubr.f32.gmra.mrb[0].mxu0 %v828
    %v1007 = vpop.f32.mrb[0].mxu0
    %v1008 = vadd.f32 %v797, %v1007
    %v1009 = vpop.f32.mrb[0].mxu0
    %1010 = vmatprep.mubr.f32.mxu0 0.0
    %1011 = vmatmul.mubr.f32.gmra.mrb[0].mxu0 %v831
    %v1012 = vpop.f32.mrb[0].mxu0
    %v1013 = vadd.f32 %v797, %v1012
    %v1014 = vpop.f32.mrb[0].mxu0
    %1015 = vmatprep.mubr.f32.mxu0 0.0
    %1016 = vmatmul.mubr.f32.gmra.mrb[0].mxu0 %v834
    %v1017 = vpop.f32.mrb[0].mxu0
    %v1018 = vadd.f32 %v797, %v1017
    %v1019 = vpop.f32.mrb[0].mxu0
    %1020 = vmatprep.mubr.f32.mxu0 0.0
    %1021 = vmatmul.mubr.f32.gmra.mrb[0].mxu0 %v837
    %v1022 = vpop.f32.mrb[0].mxu0
    %v1023 = vadd.f32 %v797, %v1022
    %v1024 = vpop.f32.mrb[0].mxu0
    %1025 = vmatprep.mubr.f32.mxu0 0.0
    %1026 = vmatmul.mubr.f32.gmra.mrb[0].mxu0 %v840
    %v1027 = vpop.f32.mrb[0].mxu0
    %v1028 = vadd.f32 %v797, %v1027
    %v1029 = vpop.f32.mrb[0].mxu0
    %1030 = vmatprep.mubr.f32.mxu0 0.0
    %1031 = vmatmul.mubr.f32.gmra.mrb[0].mxu0 %v843
    %v1032 = vpop.f32.mrb[0].mxu0
    %v1033 = vadd.f32 %v797, %v1032
    %v1034 = vpop.f32.mrb[0].mxu0
    %1035 = vmatprep.mubr.f32.mxu0 0.0
    %1036 = vmatmul.mubr.f32.gmra.mrb[0].mxu0 %v846
    %v1037 = vpop.f32.mrb[0].mxu0
    %v1038 = vadd.f32 %v797, %v1037
    %v1039 = vpop.f32.mrb[0].mxu0
    %1040 = vmatprep.mubr.f32.mxu0 0.0
    %1041 = vmatmul.mubr.f32.gmra.mrb[0].mxu0 %v849
    %v1042 = vpop.f32.mrb[0].mxu0
    %v1043 = vadd.f32 %v797, %v1042
    %v1044 = vpop.f32.mrb[0].mxu0
    %1045 = vmatprep.mubr.f32.mxu0 0.0
    %1046 = vmatmul.mubr.f32.gmra.mrb[0].mxu0 %v852
    %v1047 = vpop.f32.mrb[0].mxu0
    %v1048 = vadd.f32 %v797, %v1047
    %v1049 = vpop.f32.mrb[0].mxu0
    %1050 = vmatprep.mubr.f32.mxu0 0.0
    %1051 = vmatmul.mubr.f32.gmra.mrb[0].mxu0 %v855
    %v1052 = vpop.f32.mrb[0].mxu0
    %v1053 = vadd.f32 %v797, %v1052
    %v1054 = vpop.f32.mrb[0].mxu0
    %1055 = vmatprep.mubr.f32.mxu0 0.0
    %1056 = vmatmul.mubr.f32.gmra.mrb[0].mxu0 %v858
    %v1057 = vpop.f32.mrb[0].mxu0
    %v1058 = vadd.f32 %v797, %v1057
    %v1059 = vpop.f32.mrb[0].mxu0
    %1060 = vmatprep.mubr.f32.mxu0 0.0
    %1061 = vmatmul.mubr.f32.gmra.mrb[0].mxu0 %v861
    %v1062 = vpop.f32.mrb[0].mxu0
    %v1063 = vadd.f32 %v797, %v1062
    %v1064 = vpop.f32.mrb[0].mxu0
    %1065 = vmatprep.mubr.f32.mxu0 0.0
    %1066 = vmatmul.mubr.f32.gmra.mrb[0].mxu0 %v864
    %v1067 = vpop.f32.mrb[0].mxu0
    %v1068 = vadd.f32 %v797, %v1067
    %v1069 = vpop.f32.mrb[0].mxu0
    %1070 = vmatprep.mubr.f32.mxu0 0.0
    %1071 = vmatmul.mubr.f32.gmra.mrb[0].mxu0 %v867
    %v1072 = vpop.f32.mrb[0].mxu0
    %v1073 = vadd.f32 %v797, %v1072
    %v1074 = vpop.f32.mrb[0].mxu0
    %1075 = vmatprep.mubr.f32.mxu0 0.0
    %1076 = vmatmul.mubr.f32.gmra.mrb[0].mxu0 %v870
    %v1077 = vpop.f32.mrb[0].mxu0
    %v1078 = vadd.f32 %v797, %v1077
    %v1079 = vpop.f32.mrb[0].mxu0
    %1080 = vmatprep.mubr.f32.mxu0 0.0
    %1081 = vmatmul.mubr.f32.gmra.mrb[0].mxu0 %v873
    %v1082 = vpop.f32.mrb[0].mxu0
    %v1083 = vadd.f32 %v797, %v1082
    %v1084 = vpop.f32.mrb[0].mxu0
    %1085 = vmatprep.mubr.f32.mxu0 0.0
    %1086 = vmatmul.mubr.f32.gmra.mrb[0].mxu0 %v876
    %v1087 = vpop.f32.mrb[0].mxu0
    %v1088 = vadd.f32 %v797, %v1087
    %v1089 = vpop.f32.mrb[0].mxu0
    %1090 = vmatprep.mubr.f32.mxu0 0.0
    %1091 = vmatmul.mubr.f32.gmra.mrb[0].mxu0 %v879
    %v1092 = vpop.f32.mrb[0].mxu0
    %v1093 = vadd.f32 %v797, %v1092
    %v1094 = vpop.f32.mrb[0].mxu0
    %1095 = vmatprep.mubr.f32.mxu0 0.0
    %1096 = vmatmul.mubr.f32.gmra.mrb[0].mxu0 %v882
    %v1097 = vpop.f32.mrb[0].mxu0
    %v1098 = vadd.f32 %v797, %v1097
    %v1099 = vpop.f32.mrb[0].mxu0
    %1100 = vmatprep.mubr.f32.mxu0 0.0
    %1101 = vmatmul.mubr.f32.gmra.mrb[0].mxu0 %v885
    %v1102 = vpop.f32.mrb[0].mxu0
    %v1103 = vadd.f32 %v797, %v1102
    %v1104 = vpop.f32.mrb[0].mxu0
    %1105 = vmatprep.mubr.f32.mxu0 0.0
    %1106 = vmatmul.mubr.f32.gmra.mrb[0].mxu0 %v888
    %v1107 = vpop.f32.mrb[0].mxu0
    %v1108 = vadd.f32 %v797, %v1107
    %v1109 = vpop.f32.mrb[0].mxu0
    %1110 = vmatprep.mubr.f32.mxu0 0.0
    %1111 = vmatmul.mubr.f32.gmra.mrb[0].mxu0 %v891
    %v1112 = vpop.f32.mrb[0].mxu0
    %v1113 = vadd.f32 %v797, %v1112
    %v1114 = vpop.f32.mrb[0].mxu0
    %1115 = vmatprep.mubr.f32.mxu0 0.0
    %1116 = vmatmul.mubr.f32.gmra.mrb[0].mxu0 %v894
    %v1117 = vpop.f32.mrb[0].mxu0
    %v1118 = vadd.f32 %v797, %v1117
    %v1119 = vpop.f32.mrb[0].mxu0
    %1120 = vdwg.mxu0
    %v1121 = vmax.f32 %v963, 0.0
    %v1122 = vmax.f32 %v968, 0.0
    %v1123 = vmax.f32 %v973, 0.0
    %v1124 = vmax.f32 %v978, 0.0
    %v1125 = vmax.f32 %v983, 0.0
    %v1126 = vmax.f32 %v988, 0.0
    %v1127 = vmax.f32 %v993, 0.0
    %v1128 = vmax.f32 %v998, 0.0
    %v1129 = vmax.f32 %v1003, 0.0
    %v1130 = vmax.f32 %v1008, 0.0
    %v1131 = vmax.f32 %v1013, 0.0
    %v1132 = vmax.f32 %v1018, 0.0
    %v1133 = vmax.f32 %v1023, 0.0
    %v1134 = vmax.f32 %v1028, 0.0
    %v1135 = vmax.f32 %v1033, 0.0
    %v1136 = vmax.f32 %v1038, 0.0
    %v1137 = vmax.f32 %v1043, 0.0
    %v1138 = vmax.f32 %v1048, 0.0
    %v1139 = vmax.f32 %v1053, 0.0
    %v1140 = vmax.f32 %v1058, 0.0
    %v1141 = vmax.f32 %v1063, 0.0
    %v1142 = vmax.f32 %v1068, 0.0
    %v1143 = vmax.f32 %v1073, 0.0
    %v1144 = vmax.f32 %v1078, 0.0
    %v1145 = vmax.f32 %v1083, 0.0
    %v1146 = vmax.f32 %v1088, 0.0
    %v1147 = vmax.f32 %v1093, 0.0
    %v1148 = vmax.f32 %v1098, 0.0
    %v1149 = vmax.f32 %v1103, 0.0
    %v1150 = vmax.f32 %v1108, 0.0
    %v1151 = vmax.f32 %v1113, 0.0
    %v1152 = vmax.f32 %v1118, 0.0
    %1153 = vst [vmem:[#allocation2] sm:$0xff] %v1121
    %1154 = vst [vmem:[#allocation2 + $0x8] sm:$0xff] %v1122
    %1155 = vst [vmem:[#allocation2 + $0x10] sm:$0xff] %v1123
    %1156 = vst [vmem:[#allocation2 + $0x18] sm:$0xff] %v1124
    %1157 = vst [vmem:[#allocation2 + $0x20] sm:$0xff] %v1125
    %1158 = vst [vmem:[#allocation2 + $0x28] sm:$0xff] %v1126
    %1159 = vst [vmem:[#allocation2 + $0x30] sm:$0xff] %v1127
    %1160 = vst [vmem:[#allocation2 + $0x38] sm:$0xff] %v1128
    %1161 = vst [vmem:[#allocation2 + $0x40] sm:$0xff] %v1129
    %1162 = vst [vmem:[#allocation2 + $0x48] sm:$0xff] %v1130
    %1163 = vst [vmem:[#allocation2 + $0x50] sm:$0xff] %v1131
    %1164 = vst [vmem:[#allocation2 + $0x58] sm:$0xff] %v1132
    %1165 = vst [vmem:[#allocation2 + $0x60] sm:$0xff] %v1133
    %1166 = vst [vmem:[#allocation2 + $0x68] sm:$0xff] %v1134
    %1167 = vst [vmem:[#allocation2 + $0x70] sm:$0xff] %v1135
    %1168 = vst [vmem:[#allocation2 + $0x78] sm:$0xff] %v1136
    %1169 = vst [vmem:[#allocation2 + $0x80] sm:$0xff] %v1137
    %1170 = vst [vmem:[#allocation2 + $0x88] sm:$0xff] %v1138
    %1171 = vst [vmem:[#allocation2 + $0x90] sm:$0xff] %v1139
    %1172 = vst [vmem:[#allocation2 + $0x98] sm:$0xff] %v1140
    %1173 = vst [vmem:[#allocation2 + $0xa0] sm:$0xff] %v1141
    %1174 = vst [vmem:[#allocation2 + $0xa8] sm:$0xff] %v1142
    %1175 = vst [vmem:[#allocation2 + $0xb0] sm:$0xff] %v1143
    %1176 = vst [vmem:[#allocation2 + $0xb8] sm:$0xff] %v1144
    %1177 = vst [vmem:[#allocation2 + $0xc0] sm:$0xff] %v1145
    %1178 = vst [vmem:[#allocation2 + $0xc8] sm:$0xff] %v1146
    %1179 = vst [vmem:[#allocation2 + $0xd0] sm:$0xff] %v1147
    %1180 = vst [vmem:[#allocation2 + $0xd8] sm:$0xff] %v1148
    %1181 = vst [vmem:[#allocation2 + $0xe0] sm:$0xff] %v1149
    %1182 = vst [vmem:[#allocation2 + $0xe8] sm:$0xff] %v1150
    %1183 = vst [vmem:[#allocation2 + $0xf0] sm:$0xff] %v1151
    %1184 = vst [vmem:[#allocation2 + $0xf8] sm:$0xff] %v1152
    // Predicated region
    $region30: #{tpu_custom_call.1} parent=1 // pred_check
      _
    $region31: #{tpu_custom_call.1} parent=1 // pred_check_branch
      %1186 = sbr.rel (0) target = $region33
    $region32: #{tpu_custom_call.1} parent=1 // pred_region
      %s1188 = ssub.s32 4096, 4096
      %1189 = vsyncadd [#allocation3], %s1188
      %s1190 = sshll.u32 [#allocation2], 4
      %s1191 = int_to_ptr.vmem [resolvable:$true] %s1190
      %1196 = dma.vmem_to_hbm [thread:$0]  %s1191, 4096, %s7, [#allocation3], 128, 128, 8
    $region33: #{tpu_custom_call.1} parent=1 // pred_fallthru
      _
    // Predicated region
    $region34: #{tpu_custom_call.1} parent=1 // pred_check
      _
    $region35: #{tpu_custom_call.1} parent=1 // pred_check_branch
      %1198 = sbr.rel (0) target = $region37
    $region36: #{tpu_custom_call.1} parent=1 // pred_region
      %1199 = dma.done [#allocation3], 4096
    $region37: #{tpu_custom_call.1} parent=1 // pred_fallthru
      _
    %1200 = vsyncpa [#allocation3], 1

</llo_original>
